<compile_context>
chip_gen: v5e
topology: v5e:2x2
jax: 0.10.0
libtpu: 0.0.40
codegen_flags: <defaults>
</compile_context>

<pallas_src>
import jax
import jax.numpy as jnp
from jax.experimental import pallas as pl
from jax.experimental.pallas import tpu as pltpu


def _memory_augmented_kernel(x_ref, ma_ref, mb_ref, o_ref):
    # x_ref:  (BR, D)      rows = flattened (batch, node)
    # ma_ref: (T*Mn, D)    M reshaped, for the logits matmul (contract D)
    # mb_ref: (Mn, T*D)    M transposed+reshaped, for the value matmul
    # o_ref:  (BR, T*D)    lane-dense output (T*D is a multiple of 128 here)
    BR, _ = x_ref.shape
    TMn, _ = ma_ref.shape
    Mn, _ = mb_ref.shape
    T = TMn // Mn

    xs = x_ref[...]  # (BR, D) f32, already L-reduced in the wrapper

    # One MXU matmul for all t: logits[r, t*Mn + m] = xs[r,:] . M[t,m,:]
    logits = jax.lax.dot_general(
        xs, ma_ref[...], (((1,), (1,)), ((), ())),
        preferred_element_type=jnp.float32)          # (BR, T*Mn)

    # Segmented softmax over m (per t), viewed as (BR, T, Mn).
    l3 = logits.reshape(BR, T, Mn)
    l3 = l3 - jnp.max(l3, axis=-1, keepdims=True)
    e = jnp.exp(l3)
    denom = jnp.sum(e, axis=-1, keepdims=True)        # (BR, T, 1)
    inv = pl.reciprocal(denom, approx=True)           # EUP divide (free slot)
    score = e * inv                                    # softmax over m
    ss = jnp.sum(score, axis=1)                        # (BR, Mn), summed over t

    # One MXU matmul for all t: value[r, t*D + d] = sum_m ss[r,m] * M[t,m,d]
    o_ref[...] = jnp.dot(
        ss, mb_ref[...], preferred_element_type=jnp.float32).astype(o_ref.dtype)


def _pick_block_rows(R):
    """Rows per grid step: a multiple of 8 that divides R (else R itself),
    capped at 256, preferring >= 2 grid steps so both v7x TCs get work."""
    if R % 8 != 0 or R <= 8:
        return R
    cap = min(R // 2, 256)
    br = (cap // 8) * 8
    while br >= 8 and R % br != 0:
        br -= 8
    return br if br >= 8 else R


def memory_augmented(x, M):
    """x: (B, L, N, D) f32,  M: (T, Mn, D) f32  ->  (B, T, N, D) f32."""
    B, L, N, D = x.shape
    T, Mn, Dm = M.shape
    assert D == Dm, "mem_dim mismatch between x and M"

    R = B * N
    block_rows = _pick_block_rows(R)

    # Wrapper-side prep (cheap fused XLA ops):
    #   - reduce L so the kernel never sees the (L, N, D) slab,
    #   - fold B into matmul rows,
    #   - present M in the two layouts the fused matmuls need.
    xs = jnp.sum(x, axis=1).reshape(R, D)                       # (B*N, D)
    m_a = M.reshape(T * Mn, D)                                  # (T*Mn, D)
    m_b = jnp.transpose(M, (1, 0, 2)).reshape(Mn, T * D)        # (Mn, T*D)

    out2 = pl.pallas_call(
        _memory_augmented_kernel,
        out_shape=jax.ShapeDtypeStruct((R, T * D), jnp.float32),
        grid_spec=pltpu.PrefetchScalarGridSpec(
            num_scalar_prefetch=0,
            grid=(R // block_rows,),
            in_specs=[
                pl.BlockSpec((block_rows, D), lambda r: (r, 0)),
                pl.BlockSpec((T * Mn, D), lambda r: (0, 0)),
                pl.BlockSpec((Mn, T * D), lambda r: (0, 0)),
            ],
            out_specs=pl.BlockSpec((block_rows, T * D), lambda r: (r, 0)),
        ),
        compiler_params=pltpu.CompilerParams(
            dimension_semantics=("parallel",)),
    )(xs, m_a, m_b)

    # Lane-dense (B*N, T*D) -> (B, T, N, D) (cheap layout plumbing in XLA).
    return out2.reshape(B, N, T, D).transpose(0, 2, 1, 3)


def memory_augmented_ref(x, M):
    """Pure-JAX reference with the exact PyTorch einsum semantics."""
    logits = jnp.einsum('blnd,tmd->btnm', x, M)
    score = jax.nn.softmax(logits, axis=-1)
    value = jnp.einsum('blnm,tmd->btnd', score, M)
    return value


def init_memory(key, T, mem_num, mem_dim):
    # nn.init.xavier_normal_ on a (T, mem_num, mem_dim) tensor:
    #   receptive_field = mem_dim, fan_in = mem_num*mem_dim, fan_out = T*mem_dim
    fan_in = mem_num * mem_dim
    fan_out = T * mem_dim
    std = (2.0 / (fan_in + fan_out)) ** 0.5
    return std * jax.random.normal(key, (T, mem_num, mem_dim), dtype=jnp.float32)


if __name__ == "__main__":
    B, L, N, D = 2, 8, 8, 32       # batch, seq, nodes, mem_dim
    T, MEM_NUM = 4, 16             # time steps, memory slots

    key = jax.random.PRNGKey(0)
    kx, km = jax.random.split(key)
    x = jax.random.normal(kx, (B, L, N, D), dtype=jnp.float32)
    M = init_memory(km, T, MEM_NUM, D)

    fn = jax.jit(memory_augmented)
    out = jax.block_until_ready(fn(x, M))
    ref = jax.block_until_ready(memory_augmented_ref(x, M))

    assert out.shape == (B, T, N, D), out.shape
    # Tolerance 1e-3: everything is exact f32 except the approximate EUP
    # reciprocal in the softmax (~2^-12 relative), which stays well below 1e-3;
    # a structural bug would produce errors of order 1e-1.
    max_err = float(jnp.max(jnp.abs(out - ref)))
    assert jnp.allclose(out, ref, atol=1e-3, rtol=1e-3), max_err
    print("KERNEL_OK")
</pallas_src>

<mosaic_0001>
module attributes {stable_mosaic.version = 11 : i64} {
  func.func @_memory_augmented_kernel(%arg0: i32, %arg1: memref<8x32xf32, #tpu.memory_space<vmem>>, %arg2: memref<64x32xf32, #tpu.memory_space<vmem>>, %arg3: memref<16x128xf32, #tpu.memory_space<vmem>>, %arg4: memref<8x128xf32, #tpu.memory_space<vmem>>) attributes {dimension_semantics = [#tpu.dimension_semantics<parallel>], iteration_bounds = array<i64: 2>, scalar_prefetch = 0 : i64, scratch_operands = 0 : i64, tpu.core_type = #tpu.core_type<tc>, window_params = [{transform_indices = @transform_0, window_bounds = array<i64: 8, 32>}, {pipeline_mode = #tpu.pipeline_mode<synchronous>, transform_indices = @transform_1, window_bounds = array<i64: 64, 32>}, {pipeline_mode = #tpu.pipeline_mode<synchronous>, transform_indices = @transform_2, window_bounds = array<i64: 16, 128>}, {transform_indices = @transform_3, window_bounds = array<i64: 8, 128>}]} {
    %c0 = arith.constant 0 : index
    %c0_0 = arith.constant 0 : index
    %0 = vector.load %arg1[%c0, %c0_0] : memref<8x32xf32, #tpu.memory_space<vmem>>, vector<8x32xf32>
    %c0_1 = arith.constant 0 : index
    %c0_2 = arith.constant 0 : index
    %1 = vector.load %arg2[%c0_1, %c0_2] : memref<64x32xf32, #tpu.memory_space<vmem>>, vector<64x32xf32>
    %cst = arith.constant dense<0.000000e+00> : vector<8x64xf32>
    %2 = tpu.matmul %0, %1, %cst {dimension_numbers = #tpu.dot_dimension_numbers<[1], [1], [0], [0], [0, 0, 1, 0], [], []>} : vector<8x32xf32>, vector<64x32xf32>, vector<8x64xf32> -> vector<8x64xf32>
    %3 = vector.shape_cast %2 : vector<8x64xf32> to vector<8x4x16xf32>
    %cst_3 = arith.constant dense<0xFF800000> : vector<8x4xf32>
    %4 = vector.multi_reduction <maximumf>, %3, %cst_3 [2] : vector<8x4x16xf32> to vector<8x4xf32>
    %5 = vector.shape_cast %4 : vector<8x4xf32> to vector<8x4x1xf32>
    %6 = vector.broadcast %5 : vector<8x4x1xf32> to vector<8x4x16xf32>
    %7 = arith.subf %3, %6 : vector<8x4x16xf32>
    %8 = math.exp %7 : vector<8x4x16xf32>
    %cst_4 = arith.constant dense<0.000000e+00> : vector<8x4xf32>
    %9 = vector.multi_reduction <add>, %8, %cst_4 [2] : vector<8x4x16xf32> to vector<8x4xf32>
    %10 = vector.shape_cast %9 : vector<8x4xf32> to vector<8x4x1xf32>
    %11 = tpu.reciprocal %10 {approx = true} : vector<8x4x1xf32> -> vector<8x4x1xf32>
    %12 = vector.broadcast %11 : vector<8x4x1xf32> to vector<8x4x16xf32>
    %13 = arith.mulf %8, %12 : vector<8x4x16xf32>
    %cst_5 = arith.constant dense<0.000000e+00> : vector<8x16xf32>
    %14 = vector.multi_reduction <add>, %13, %cst_5 [1] : vector<8x4x16xf32> to vector<8x16xf32>
    %c0_6 = arith.constant 0 : index
    %c0_7 = arith.constant 0 : index
    %15 = vector.load %arg3[%c0_6, %c0_7] : memref<16x128xf32, #tpu.memory_space<vmem>>, vector<16x128xf32>
    %cst_8 = arith.constant dense<0.000000e+00> : vector<8x128xf32>
    %16 = tpu.matmul %14, %15, %cst_8 {dimension_numbers = #tpu.dot_dimension_numbers<[1], [0], [0], [1], [0, 0, 1, 1], [], []>} : vector<8x16xf32>, vector<16x128xf32>, vector<8x128xf32> -> vector<8x128xf32>
    %c0_9 = arith.constant 0 : index
    %c0_10 = arith.constant 0 : index
    %17 = vector.load %arg4[%c0_9, %c0_10] : memref<8x128xf32, #tpu.memory_space<vmem>>, vector<8x128xf32>
    tpu.vector_store %arg4[%c0_9, %c0_10], %16 {strides = array<i32>} : memref<8x128xf32, #tpu.memory_space<vmem>>, vector<8x128xf32>,
    return
  }
  func.func @transform_0(%arg0: i32) -> (i32, i32) {
    %c0_i32 = arith.constant 0 : i32
    %c0_i32_0 = arith.constant 0 : i32
    return %arg0, %c0_i32 : i32, i32
  }
  func.func @transform_1(%arg0: i32) -> (i32, i32) {
    %c0_i32 = arith.constant 0 : i32
    %c0_i32_0 = arith.constant 0 : i32
    %c0_i32_1 = arith.constant 0 : i32
    return %c0_i32, %c0_i32_0 : i32, i32
  }
  func.func @transform_2(%arg0: i32) -> (i32, i32) {
    %c0_i32 = arith.constant 0 : i32
    %c0_i32_0 = arith.constant 0 : i32
    %c0_i32_1 = arith.constant 0 : i32
    return %c0_i32, %c0_i32_0 : i32, i32
  }
  func.func @transform_3(%arg0: i32) -> (i32, i32) {
    %c0_i32 = arith.constant 0 : i32
    %c0_i32_0 = arith.constant 0 : i32
    return %arg0, %c0_i32 : i32, i32
  }
}

</mosaic_0001>

<llo_original>
// kernel: memory_augmented.1
$region0: #{memory_augmented.1}
  #allocation0 [shape = 'u32[]', space=smem, size = 0x4, offset = 0x4, fixed_abs, tag = 'smem constant byte address 0x4 - core index']
  #allocation1 [shape = 'u32[72,128]{1,0:T(1,128)}', space=vmem, size = 0x9000, scoped, tag = 'internal scratch']
  %s0 = inlined_call_operand.vmem [shape: f32[16,32], index: 0, kind: input, shape index: {}]
  %s1 = inlined_call_operand.vmem [shape: f32[64,32], index: 1, kind: input, shape index: {}]
  %s2 = inlined_call_operand.vmem [shape: f32[16,128], index: 2, kind: input, shape index: {}]
  %s3 = inlined_call_operand.vmem [shape: f32[16,128], index: 3, kind: output, shape index: {}]
  %s4 = sld [smem:[#allocation0]]
  $region45: #{memory_augmented.1} parent=0
    _
  %s6 = ssub.s32 1, %s4
  %s7 = scalar_select 0, %s6, %s4
  loop: start=0, step=1, limit=4
  $region2: #{memory_augmented.1} parent=0 // loop_pre_header
    _
  $region3: #{memory_augmented.1} parent=0 // loop_header
    %s9 = sphi 0, %s13
    %p10 = scmp.ge.s32.totalorder %s9, 4
    %s19 = sphi 0, %s21
    %s22 = sphi 0, %s19
    %s23 = sphi 0, %s22
    %s39 = sphi 0, %s23
    %s43 = sphi 0, %s43
    %s45 = sphi 0, %s43
    %s46 = sphi 0, %s45
    %s60 = sphi 0, %s46
    %s64 = sphi 0, %s64
    %s66 = sphi 0, %s64
    %s67 = sphi 0, %s66
    %s81 = sphi 0, %s67
    %s87 = sphi 0, %s89
    %s90 = sphi 0, %s87
    %s91 = sphi 0, %s90
    %s107 = sphi 0, %s91
  $region4: #{memory_augmented.1} parent=0 // loop_header_branch
    %12 = sbr.rel (%p10) target = $region8
  $region5: #{memory_augmented.1} parent=0 // loop_body
    %s14 = ssub.s32 %s9, 1
    %s15 = ssub.s32 %s9, 2
    %s16 = sadd.s32 %s9, 1
    %s17 = ssub.s32 %s9, %s16
    %p18 = scmp.eq.s32.totalorder %s17, 0
    %s20 = sadd.s32 %s19, 1
    %s21 = scalar_select %p18, %s19, %s20
    %p24 = pneg %p18
    %p25 = scmp.eq.s32.totalorder %s9, 1
    %p26 = por %p24, %p25
    %p27 = scmp.ne.s32.totalorder %s19, %s22
    %p28 = scmp.eq.s32.totalorder %s9, 0
    %p29 = por %p27, %p28
    %p30 = scmp.ne.s32.totalorder %s19, %s22
    %p31 = scmp.eq.s32.totalorder %s14, 1
    %p32 = por %p30, %p31
    %p33 = scmp.ne.s32.totalorder %s22, %s23
    %p34 = scmp.eq.s32.totalorder %s14, 0
    %p35 = por %p33, %p34
    %p36 = scmp.ne.s32.totalorder %s22, %s23
    %p37 = scmp.eq.s32.totalorder %s15, 1
    %p38 = por %p36, %p37
    %p40 = scmp.ne.s32.totalorder %s23, %s39
    %p41 = scmp.eq.s32.totalorder %s15, 0
    %p42 = por %p40, %p41
    %s44 = sadd.s32 %s43, 1
    %p47 = scmp.eq.s32.totalorder %s9, 1
    %p48 = scmp.ne.s32.totalorder %s43, %s45
    %p49 = scmp.eq.s32.totalorder %s9, 0
    %p50 = por %p48, %p49
    %p51 = scmp.ne.s32.totalorder %s43, %s45
    %p52 = scmp.eq.s32.totalorder %s14, 1
    %p53 = por %p51, %p52
    %p54 = scmp.ne.s32.totalorder %s45, %s46
    %p55 = scmp.eq.s32.totalorder %s14, 0
    %p56 = por %p54, %p55
    %p57 = scmp.ne.s32.totalorder %s45, %s46
    %p58 = scmp.eq.s32.totalorder %s15, 1
    %p59 = por %p57, %p58
    %p61 = scmp.ne.s32.totalorder %s46, %s60
    %p62 = scmp.eq.s32.totalorder %s15, 0
    %p63 = por %p61, %p62
    %s65 = sadd.s32 %s64, 1
    %p68 = scmp.eq.s32.totalorder %s9, 1
    %p69 = scmp.ne.s32.totalorder %s64, %s66
    %p70 = scmp.eq.s32.totalorder %s9, 0
    %p71 = por %p69, %p70
    %p72 = scmp.ne.s32.totalorder %s64, %s66
    %p73 = scmp.eq.s32.totalorder %s14, 1
    %p74 = por %p72, %p73
    %p75 = scmp.ne.s32.totalorder %s66, %s67
    %p76 = scmp.eq.s32.totalorder %s14, 0
    %p77 = por %p75, %p76
    %p78 = scmp.ne.s32.totalorder %s66, %s67
    %p79 = scmp.eq.s32.totalorder %s15, 1
    %p80 = por %p78, %p79
    %p82 = scmp.ne.s32.totalorder %s67, %s81
    %p83 = scmp.eq.s32.totalorder %s15, 0
    %p84 = por %p82, %p83
    %s85 = ssub.s32 %s9, %s16
    %p86 = scmp.eq.s32.totalorder %s85, 0
    %s88 = sadd.s32 %s87, 1
    %s89 = scalar_select %p86, %s87, %s88
    %p92 = pneg %p86
    %p93 = scmp.eq.s32.totalorder %s9, 1
    %p94 = por %p92, %p93
    %p95 = scmp.ne.s32.totalorder %s87, %s90
    %p96 = scmp.eq.s32.totalorder %s9, 0
    %p97 = por %p95, %p96
    %p98 = scmp.ne.s32.totalorder %s87, %s90
    %p99 = scmp.eq.s32.totalorder %s14, 1
    %p100 = por %p98, %p99
    %p101 = scmp.ne.s32.totalorder %s90, %s91
    %p102 = scmp.eq.s32.totalorder %s14, 0
    %p103 = por %p101, %p102
    %p104 = scmp.ne.s32.totalorder %s90, %s91
    %p105 = scmp.eq.s32.totalorder %s15, 1
    %p106 = por %p104, %p105
    %p108 = scmp.ne.s32.totalorder %s91, %s107
    %p109 = scmp.eq.s32.totalorder %s15, 0
    %p110 = por %p108, %p109
    %p111 = scmp.le.s32.totalorder 1, %s9
    %p112 = scmp.lt.s32.totalorder %s9, 3
    %p113 = pnand %p111, %p112
    %p114 = pneg %p113
    // Predicated region
    $region9: #{memory_augmented.1} parent=5 // pred_check
      _
    $region10: #{memory_augmented.1} parent=5 // pred_check_branch
      %116 = sbr.rel (%p113) target = $region12
    $region11: #{memory_augmented.1} parent=5 // pred_region
      %s117 = ssub.s32 %s9, 1
      // Predicated region
      $region13: #{memory_augmented.1} parent=11 // pred_check
        %p118 = pneg %p56
      $region14: #{memory_augmented.1} parent=11 // pred_check_branch
        %120 = sbr.rel (%p118) target = $region16
      $region15: #{memory_augmented.1} parent=11 // pred_region
        _
      $region16: #{memory_augmented.1} parent=11 // pred_fallthru
        _
      // Predicated region
      $region17: #{memory_augmented.1} parent=11 // pred_check
        %p121 = pneg %p77
      $region18: #{memory_augmented.1} parent=11 // pred_check_branch
        %123 = sbr.rel (%p121) target = $region20
      $region19: #{memory_augmented.1} parent=11 // pred_region
        _
      $region20: #{memory_augmented.1} parent=11 // pred_fallthru
        _
    $region12: #{memory_augmented.1} parent=5 // pred_fallthru
      _
    %p124 = scmp.lt.s32.totalorder %s9, 2
    // Predicated region
    $region21: #{memory_augmented.1} parent=5 // pred_check
      %p125 = pneg %p124
    $region22: #{memory_augmented.1} parent=5 // pred_check_branch
      %127 = sbr.rel (%p125) target = $region24
    $region23: #{memory_augmented.1} parent=5 // pred_region
      // Predicated region
      $region25: #{memory_augmented.1} parent=23 // pred_check
        %p128 = pneg %p29
      $region26: #{memory_augmented.1} parent=23 // pred_check_branch
        %130 = sbr.rel (%p128) target = $region28
      $region27: #{memory_augmented.1} parent=23 // pred_region
        %p131 = scmp.lt.s32.totalorder %s9, 1
        %s132 = scalar_select %p131, %s9, 1
        %s133 = smul.addr %s132, 8
        %s134 = scalar_lea.vmem %s0, %s133
      $region28: #{memory_augmented.1} parent=23 // pred_fallthru
        _
    $region24: #{memory_augmented.1} parent=5 // pred_fallthru
      _
    %p135 = scmp.le.s32.totalorder 1, %s9
    %p136 = scmp.lt.s32.totalorder %s9, 3
    %p137 = pnand %p135, %p136
    %p138 = pneg %p137
    // Predicated region
    $region29: #{memory_augmented.1} parent=5 // pred_check
      _
    $region30: #{memory_augmented.1} parent=5 // pred_check_branch
      %140 = sbr.rel (%p137) target = $region32
    $region31: #{memory_augmented.1} parent=5 // pred_region
      %s141 = ssub.s32 %s9, 1
      %p142 = scmp.lt.s32.totalorder %s14, 1
      %s143 = scalar_select %p142, %s14, 1
      %s144 = smul.addr %s143, 8
      %s145 = scalar_lea.vmem %s0, %s144
      %p146 = pneg %p35
      %p147 = pneg %p32
      %p148 = pneg %p56
      %p149 = pneg %p53
      %p150 = pneg %p77
      %p151 = pneg %p74
      %p152 = pneg %p103
      %p153 = pneg %p100
      %p154 = scmp.lt.s32.totalorder %s14, 1
      %s155 = scalar_select %p154, %s14, 1
      %s156 = smul.addr %s155, 8
      %s157 = scalar_lea.vmem %s3, %s156
      %p158 = scmp.lt.s32.totalorder %s14, 1
      %s159 = scalar_select %p158, %s14, 1
      %s160 = smul.addr %s159, 8
      %s161 = scalar_lea.vmem %s0, %s160
      %p162 = scmp.lt.s32.totalorder %s14, 1
      %s163 = scalar_select %p162, %s14, 1
      %s164 = smul.addr %s163, 8
      %s165 = scalar_lea.vmem %s3, %s164
      %v166 = vld [vmem:[%s161] sm:$0xff]
      %v167 = vld [vmem:[%s1] sm:$0xff]
      %v168 = vld [vmem:[%s1 + $0x8] sm:$0xff]
      %v169 = vld [vmem:[%s1 + $0x10] sm:$0xff]
      %v170 = vld [vmem:[%s1 + $0x18] sm:$0xff]
      %v171 = vld [vmem:[%s1 + $0x20] sm:$0xff]
      %v172 = vld [vmem:[%s1 + $0x28] sm:$0xff]
      %v173 = vld [vmem:[%s1 + $0x30] sm:$0xff]
      %v174 = vld [vmem:[%s1 + $0x38] sm:$0xff]
      %vm175 = vcmask 261120
      %v177 = vsel %vm175, %v166, 0
      %v180 = vsel %vm175, %v167, 0
      %v183 = vsel %vm175, %v168, 0
      %v186 = vsel %vm175, %v169, 0
      %v189 = vsel %vm175, %v170, 0
      %v192 = vsel %vm175, %v171, 0
      %v195 = vsel %vm175, %v172, 0
      %v198 = vsel %vm175, %v173, 0
      %v201 = vsel %vm175, %v174, 0
      %203 = vmatpush.xpose.msra.mxu0 0.0
      %204 = vmatpush.xpose.msra.mxu0 0.0
      %205 = vmatpush.xpose.msra.mxu0 0.0
      %206 = vmatpush.xpose.msra.mxu0 0.0
      %207 = vmatpush.xpose.msra.mxu0 0.0
      %208 = vmatpush.xpose.msra.mxu0 0.0
      %209 = vmatpush.xpose.msra.mxu0 0.0
      %210 = vmatpush.xpose.msra.mxu0 0.0
      %211 = vmatpush.xpose.msra.mxu0 %v201
      %212 = vmatpush.xpose.msra.mxu0 %v198
      %213 = vmatpush.xpose.msra.mxu0 %v195
      %214 = vmatpush.xpose.msra.mxu0 %v192
      %215 = vmatpush.xpose.msra.mxu0 %v189
      %216 = vmatpush.xpose.msra.mxu0 %v186
      %217 = vmatpush.xpose.msra.mxu0 %v183
      %218 = vmatpush.xpose.msra.mxu0 %v180
      %219 = vmatmul.f32.gmra.mxu0 %v177
      %v220 = vpop.f32.mrf.mxu0
      %v221 = vadd.f32 0.0, %v220
      %222 = vdwg.mxu0
      %224 = vrot.lane.b32.xlu0 %v221, 112
      %v225 = vpop.permute.xlu0 %224
      %227 = vrot.lane.b32.xlu0 %v221, 96
      %v228 = vpop.permute.xlu0 %227
      %230 = vrot.lane.b32.xlu0 %v221, 80
      %v231 = vpop.permute.xlu0 %230
      %v233 = vrot.slane %v228, 4
      %vm234 = vcmask 1047556
      %v235 = vsel %vm234, %v233, %v221
      %v236 = vrot.slane %v221, 4
      %v237 = vsel %vm234, %v228, %v236
      %v239 = vunpack.c.l.s4 1983009808
      %v240 = vunpack.c.0.s8 %v239
      %v241 = vperm.slane %v235, %v240
      %v243 = vunpack.c.l.s4 1983009808
      %v244 = vunpack.c.0.s8 %v243
      %v245 = vperm.slane %v237, %v244
      %v246 = vrot.slane %v231, 4
      %v247 = vsel %vm234, %v246, %v225
      %v248 = vrot.slane %v225, 4
      %v249 = vsel %vm234, %v231, %v248
      %v251 = vunpack.c.l.s4 1983009808
      %v252 = vunpack.c.0.s8 %v251
      %v253 = vperm.slane %v247, %v252
      %v255 = vunpack.c.l.s4 1983009808
      %v256 = vunpack.c.0.s8 %v255
      %v257 = vperm.slane %v249, %v256
      %v258 = vrot.slane %v253, 4
      %v259 = vsel %vm234, %v258, %v241
      %v260 = vrot.slane %v241, 4
      %v261 = vsel %vm234, %v253, %v260
      %v263 = vunpack.c.l.s4 1934713408
      %v264 = vunpack.c.0.s8 %v263
      %v265 = vperm.slane %v259, %v264
      %v267 = vunpack.c.l.s4 1934713408
      %v268 = vunpack.c.0.s8 %v267
      %v269 = vperm.slane %v261, %v268
      %v270 = vrot.slane %v257, 4
      %v271 = vsel %vm234, %v270, %v245
      %v272 = vrot.slane %v245, 4
      %v273 = vsel %vm234, %v257, %v272
      %v275 = vunpack.c.l.s4 1934713408
      %v276 = vunpack.c.0.s8 %v275
      %v277 = vperm.slane %v271, %v276
      %v279 = vunpack.c.l.s4 1934713408
      %v280 = vunpack.c.0.s8 %v279
      %v281 = vperm.slane %v273, %v280
      %v282 = vrot.slane %v265, 4
      %v283 = vsel %vm234, 0.0, %v282
      %v284 = vrot.slane %v269, 4
      %v285 = vsel %vm234, 0.0, %v284
      %v286 = vrot.slane %v277, 4
      %v287 = vsel %vm234, 0.0, %v286
      %v288 = vrot.slane %v281, 4
      %v289 = vsel %vm234, 0.0, %v288
      %vm290 = vcmask 125952
      %v291 = vsel %vm290, %v265, -inf
      %292 = vmax.xlane.f32.xlu0 %v291
      %v293 = vpop.xlane.xlu0 %292
      %v294 = vsel %vm290, %v283, -inf
      %295 = vmax.xlane.f32.xlu0 %v294
      %v296 = vpop.xlane.xlu0 %295
      %v297 = vsel %vm290, %v269, -inf
      %298 = vmax.xlane.f32.xlu0 %v297
      %v299 = vpop.xlane.xlu0 %298
      %v300 = vsel %vm290, %v285, -inf
      %301 = vmax.xlane.f32.xlu0 %v300
      %v302 = vpop.xlane.xlu0 %301
      %v303 = vsel %vm290, %v277, -inf
      %304 = vmax.xlane.f32.xlu0 %v303
      %v305 = vpop.xlane.xlu0 %304
      %v306 = vsel %vm290, %v287, -inf
      %307 = vmax.xlane.f32.xlu0 %v306
      %v308 = vpop.xlane.xlu0 %307
      %v309 = vsel %vm290, %v281, -inf
      %310 = vmax.xlane.f32.xlu0 %v309
      %v311 = vpop.xlane.xlu0 %310
      %v312 = vsel %vm290, %v289, -inf
      %313 = vmax.xlane.f32.xlu0 %v312
      %v314 = vpop.xlane.xlu0 %313
      %v315 = vsub.f32 %v265, %v293
      %v316 = vsub.f32 %v283, %v296
      %v317 = vsub.f32 %v269, %v299
      %v318 = vsub.f32 %v285, %v302
      %v319 = vsub.f32 %v277, %v305
      %v320 = vsub.f32 %v287, %v308
      %v321 = vsub.f32 %v281, %v311
      %v322 = vsub.f32 %v289, %v314
      %v323 = vmul.f32 %v315, 1.442695
      %v324 = vpow.pop %v323
      %v325 = vmul.f32 %v316, 1.442695
      %v326 = vpow.pop %v325
      %v327 = vmul.f32 %v317, 1.442695
      %v328 = vpow.pop %v327
      %v329 = vmul.f32 %v318, 1.442695
      %v330 = vpow.pop %v329
      %v331 = vmul.f32 %v319, 1.442695
      %v332 = vpow.pop %v331
      %v333 = vmul.f32 %v320, 1.442695
      %v334 = vpow.pop %v333
      %v335 = vmul.f32 %v321, 1.442695
      %v336 = vpow.pop %v335
      %v337 = vmul.f32 %v322, 1.442695
      %v338 = vpow.pop %v337
      %v339 = vsel %vm290, %v324, 0.0
      %340 = vadd.xlane.f32.xlu0 %v339
      %v341 = vpop.xlane.xlu0 %340
      %v342 = vsel %vm290, %v326, 0.0
      %343 = vadd.xlane.f32.xlu0 %v342
      %v344 = vpop.xlane.xlu0 %343
      %v345 = vsel %vm290, %v328, 0.0
      %346 = vadd.xlane.f32.xlu0 %v345
      %v347 = vpop.xlane.xlu0 %346
      %v348 = vsel %vm290, %v330, 0.0
      %349 = vadd.xlane.f32.xlu0 %v348
      %v350 = vpop.xlane.xlu0 %349
      %v351 = vsel %vm290, %v332, 0.0
      %352 = vadd.xlane.f32.xlu0 %v351
      %v353 = vpop.xlane.xlu0 %352
      %v354 = vsel %vm290, %v334, 0.0
      %355 = vadd.xlane.f32.xlu0 %v354
      %v356 = vpop.xlane.xlu0 %355
      %v357 = vsel %vm290, %v336, 0.0
      %358 = vadd.xlane.f32.xlu0 %v357
      %v359 = vpop.xlane.xlu0 %358
      %v360 = vsel %vm290, %v338, 0.0
      %361 = vadd.xlane.f32.xlu0 %v360
      %v362 = vpop.xlane.xlu0 %361
      %v363 = vrcp.pop %v341
      %v364 = vrcp.pop %v344
      %v365 = vrcp.pop %v347
      %v366 = vrcp.pop %v350
      %v367 = vrcp.pop %v353
      %v368 = vrcp.pop %v356
      %v369 = vrcp.pop %v359
      %v370 = vrcp.pop %v362
      %v371 = vmul.f32 %v324, %v363
      %v372 = vmul.f32 %v326, %v364
      %v373 = vmul.f32 %v328, %v365
      %v374 = vmul.f32 %v330, %v366
      %v375 = vmul.f32 %v332, %v367
      %v376 = vmul.f32 %v334, %v368
      %v377 = vmul.f32 %v336, %v369
      %v378 = vmul.f32 %v338, %v370
      %v379 = vsel %vm290, %v371, 0.0
      %v380 = vrot.slane %v379, 4
      %v381 = vadd.f32 %v379, %v380
      %v382 = vrot.slane %v381, 2
      %v383 = vadd.f32 %v381, %v382
      %v384 = vrot.slane %v383, 1
      %v385 = vadd.f32 %v383, %v384
      %v386 = vsel %vm290, %v372, 0.0
      %v387 = vrot.slane %v386, 4
      %v388 = vadd.f32 %v386, %v387
      %v389 = vrot.slane %v388, 2
      %v390 = vadd.f32 %v388, %v389
      %v391 = vrot.slane %v390, 1
      %v392 = vadd.f32 %v390, %v391
      %v393 = vsel %vm290, %v373, 0.0
      %v394 = vrot.slane %v393, 4
      %v395 = vadd.f32 %v393, %v394
      %v396 = vrot.slane %v395, 2
      %v397 = vadd.f32 %v395, %v396
      %v398 = vrot.slane %v397, 1
      %v399 = vadd.f32 %v397, %v398
      %v400 = vsel %vm290, %v374, 0.0
      %v401 = vrot.slane %v400, 4
      %v402 = vadd.f32 %v400, %v401
      %v403 = vrot.slane %v402, 2
      %v404 = vadd.f32 %v402, %v403
      %v405 = vrot.slane %v404, 1
      %v406 = vadd.f32 %v404, %v405
      %v407 = vsel %vm290, %v375, 0.0
      %v408 = vrot.slane %v407, 4
      %v409 = vadd.f32 %v407, %v408
      %v410 = vrot.slane %v409, 2
      %v411 = vadd.f32 %v409, %v410
      %v412 = vrot.slane %v411, 1
      %v413 = vadd.f32 %v411, %v412
      %v414 = vsel %vm290, %v376, 0.0
      %v415 = vrot.slane %v414, 4
      %v416 = vadd.f32 %v414, %v415
      %v417 = vrot.slane %v416, 2
      %v418 = vadd.f32 %v416, %v417
      %v419 = vrot.slane %v418, 1
      %v420 = vadd.f32 %v418, %v419
      %v421 = vsel %vm290, %v377, 0.0
      %v422 = vrot.slane %v421, 4
      %v423 = vadd.f32 %v421, %v422
      %v424 = vrot.slane %v423, 2
      %v425 = vadd.f32 %v423, %v424
      %v426 = vrot.slane %v425, 1
      %v427 = vadd.f32 %v425, %v426
      %v428 = vsel %vm290, %v378, 0.0
      %v429 = vrot.slane %v428, 4
      %v430 = vadd.f32 %v428, %v429
      %v431 = vrot.slane %v430, 2
      %v432 = vadd.f32 %v430, %v431
      %v433 = vrot.slane %v432, 1
      %v434 = vadd.f32 %v432, %v433
      %v435 = vld [vmem:[%s2] sm:$0xff]
      %v436 = vld [vmem:[%s2 + $0x8] sm:$0xff]
      %vm445 = vcmask 1041409
      %v446 = vsel %vm445, %v392, %v385
      %vm447 = vcmask 1042434
      %v448 = vsel %vm447, %v399, %v446
      %vm449 = vcmask 1043459
      %v450 = vsel %vm449, %v406, %v448
      %vm451 = vcmask 1044484
      %v452 = vsel %vm451, %v413, %v450
      %vm453 = vcmask 1045509
      %v454 = vsel %vm453, %v420, %v452
      %vm455 = vcmask 1046534
      %v456 = vsel %vm455, %v427, %v454
      %vm457 = vcmask 1047559
      %v458 = vsel %vm457, %v434, %v456
      %vm459 = vcmask 130048
      %v460 = vsel %vm459, %v458, 0
      %462 = vmatpush.msra.mxu0 0.0
      %463 = vmatpush.msra.mxu0 0.0
      %464 = vmatpush.msra.mxu0 0.0
      %465 = vmatpush.msra.mxu0 0.0
      %466 = vmatpush.msra.mxu0 0.0
      %467 = vmatpush.msra.mxu0 0.0
      %468 = vmatpush.msra.mxu0 0.0
      %469 = vmatpush.msra.mxu0 0.0
      %470 = vmatpush.msra.mxu0 0.0
      %471 = vmatpush.msra.mxu0 0.0
      %472 = vmatpush.msra.mxu0 0.0
      %473 = vmatpush.msra.mxu0 0.0
      %474 = vmatpush.msra.mxu0 0.0
      %475 = vmatpush.msra.mxu0 0.0
      %476 = vmatpush.msra.mxu0 %v436
      %477 = vmatpush.msra.mxu0 %v435
      %478 = vmatmul.f32.gmra.mxu0 %v460
      %v479 = vpop.f32.mrf.mxu0
      %v480 = vadd.f32 0.0, %v479
      %481 = vdwg.mxu0
      %482 = vst [vmem:[%s165] sm:$0xff] %v480
      %p483 = scmp.lt.s32.totalorder %s14, 1
      %s484 = scalar_select %p483, %s14, 1
      %s485 = smul.addr %s484, 8
      %s486 = scalar_lea.vmem %s3, %s485
      // Predicated region
      $region33: #{memory_augmented.1} parent=31 // pred_check
        %p487 = pneg %p100
      $region34: #{memory_augmented.1} parent=31 // pred_check_branch
        %489 = sbr.rel (%p487) target = $region36
      $region35: #{memory_augmented.1} parent=31 // pred_region
        _
      $region36: #{memory_augmented.1} parent=31 // pred_fallthru
        _
    $region32: #{memory_augmented.1} parent=5 // pred_fallthru
      _
    %p490 = scmp.le.s32.totalorder 2, %s9
    // Predicated region
    $region37: #{memory_augmented.1} parent=5 // pred_check
      %p491 = pneg %p490
    $region38: #{memory_augmented.1} parent=5 // pred_check_branch
      %493 = sbr.rel (%p491) target = $region40
    $region39: #{memory_augmented.1} parent=5 // pred_region
      %s494 = ssub.s32 %s9, 2
      // Predicated region
      $region41: #{memory_augmented.1} parent=39 // pred_check
        %p495 = pneg %p106
      $region42: #{memory_augmented.1} parent=39 // pred_check_branch
        %497 = sbr.rel (%p495) target = $region44
      $region43: #{memory_augmented.1} parent=39 // pred_region
        %p498 = scmp.lt.s32.totalorder %s15, 1
        %s499 = scalar_select %p498, %s15, 1
        %s500 = smul.addr %s499, 8
        %s501 = scalar_lea.vmem %s3, %s500
      $region44: #{memory_augmented.1} parent=39 // pred_fallthru
        _
    $region40: #{memory_augmented.1} parent=5 // pred_fallthru
      _
  $region6: #{memory_augmented.1} parent=0 // loop_footer
    %s13 = sadd.s32 1, %s9
  $region7: #{memory_augmented.1} parent=0 // loop_footer_branch
    %8 = sbr.rel target = $region3
  $region8: #{memory_augmented.1} parent=0 // loop_exit
    _

</llo_original>
